<compile_context>
chip_gen: v7x
topology: tpu7x:2x2x1
jax: 0.10.0
libtpu: 0.0.40
codegen_flags: <defaults>
</compile_context>

<pallas_src>
import jax
import jax.numpy as jnp
from jax.experimental import pallas as pl
from jax.experimental.pallas import tpu as pltpu


def _round_up(x, m):
    return ((x + m - 1) // m) * m


def _vmem_capacity_bytes():
    try:
        return int(pltpu.get_tpu_info().vmem_capacity_bytes)
    except Exception:
        return 64 << 20   # v7x floor -> safe default on every generation


def _largest_rc_divisor(rc_pad, cap):
    """Largest divisor of rc_pad that is a multiple of 128 and <= cap."""
    n = rc_pad // 128
    cap_n = max(1, cap // 128)
    best = 1
    for d in range(1, n + 1):
        if n % d == 0 and d <= cap_n:
            best = d
    return best * 128


def _pick_point_tile(n_rows, tile_n_max):
    """Point-axis tile: multiple of 128, VMEM-capped, >=2 blocks for megacore."""
    n128 = _round_up(max(n_rows, 1), 128)
    tile = max(128, min((tile_n_max // 128) * 128, n128))
    # v7x has 2 TensorCores: keep at least 2 point blocks when there is work.
    if n128 // tile < 2 and n128 >= 256:
        tile = max(128, _round_up(n128 // 2, 128))
    return tile


# ----------------------------------------------------------------------------
# Pallas kernels
# ----------------------------------------------------------------------------
def _subm_gemm_kernel(x_ref, w_ref, b_ref, o_ref):
    # Single RC block: whole contraction in one MXU dot, weight VMEM-resident
    # (constant index_map -> DMA'd once).  No scratch, no reduction axis.
    acc = jnp.dot(x_ref[...], w_ref[...], preferred_element_type=jnp.float32)
    o_ref[...] = (acc + b_ref[...]).astype(o_ref.dtype)


def _subm_gemm_red_kernel(x_ref, w_ref, b_ref, o_ref):
    # RC-reduction fallback: accumulate straight into the f32 output block
    # (VMEM-resident across the reduction axis); bias is the k==0 initializer.
    @pl.when(pl.program_id(1) == 0)
    def _init():
        o_ref[...] = jnp.zeros_like(o_ref) + b_ref[...]

    o_ref[...] += jnp.dot(x_ref[...], w_ref[...],
                          preferred_element_type=jnp.float32)


def _subm_gemm(cols, w_flat, bias, *, tile_n, tile_rc, out_dtype, real_dims):
    """cols: [N_pad, RC_pad] bf16, w_flat: [RC_pad, K_pad] bf16,
       bias: [1, K_pad] f32  ->  [N_pad, K_pad] (out_dtype or f32)."""
    n_pad, rc_pad = cols.shape
    k_pad = w_flat.shape[1]
    assert n_pad % tile_n == 0 and rc_pad % tile_rc == 0

    n_rc = rc_pad // tile_rc
    single = n_rc == 1
    out_dt = out_dtype if single else jnp.float32   # fallback accumulates in o_ref
    itm = cols.dtype.itemsize
    out_itm = jnp.dtype(out_dt).itemsize

    n_real, rc_real, k_real = real_dims
    cost = pl.CostEstimate(
        flops=2 * n_real * rc_real * k_real,
        transcendentals=0,
        bytes_accessed=(n_real * rc_real * itm + rc_real * k_real * itm
                        + n_real * k_real * out_itm + k_real * 4))

    # double-buffered input/output blocks (weight/bias counted x2 to be safe)
    vmem_need = 2 * (tile_n * tile_rc * itm + tile_rc * k_pad * itm
                     + k_pad * 4 + tile_n * k_pad * out_itm)
    vmem_limit = int(min(int(0.9 * _vmem_capacity_bytes()),
                         max(vmem_need + (4 << 20), 32 << 20)))

    if single:
        grid = (n_pad // tile_n,)
        in_specs = [
            pl.BlockSpec((tile_n, rc_pad), lambda i: (i, 0)),
            pl.BlockSpec((rc_pad, k_pad), lambda i: (0, 0)),   # DMA'd once
            pl.BlockSpec((1, k_pad), lambda i: (0, 0)),
        ]
        out_specs = pl.BlockSpec((tile_n, k_pad), lambda i: (i, 0))
        kernel = _subm_gemm_kernel
        dims = ("parallel",)
    else:
        grid = (n_pad // tile_n, n_rc)                          # reduction last
        in_specs = [
            pl.BlockSpec((tile_n, tile_rc), lambda i, k: (i, k)),
            pl.BlockSpec((tile_rc, k_pad), lambda i, k: (k, 0)),
            pl.BlockSpec((1, k_pad), lambda i, k: (0, 0)),
        ]
        out_specs = pl.BlockSpec((tile_n, k_pad), lambda i, k: (i, 0))
        kernel = _subm_gemm_red_kernel
        dims = ("parallel", "arbitrary")

    return pl.pallas_call(
        kernel,
        out_shape=jax.ShapeDtypeStruct((n_pad, k_pad), out_dt),
        grid_spec=pltpu.PrefetchScalarGridSpec(
            num_scalar_prefetch=0,
            grid=grid,
            in_specs=in_specs,
            out_specs=out_specs,
        ),
        compiler_params=pltpu.CompilerParams(
            dimension_semantics=dims,
            vmem_limit_bytes=vmem_limit,
        ),
        cost_estimate=cost,
    )(cols, w_flat, bias)


# ----------------------------------------------------------------------------
# Module
# ----------------------------------------------------------------------------
def _triple(v):
    if isinstance(v, int):
        return (v, v, v)
    return tuple(v)


class NaiveSubMConv3d:
    """JAX/Pallas port of ld_triton NaiveSubMConv3d (forward only)."""

    def __init__(self, in_channels, out_channels, kernel_size, stride=1,
                 padding=0, dilation=1, bias=True, dtype=jnp.float32,
                 key=jax.random.PRNGKey(0)):
        self.C = in_channels
        self.K = out_channels
        self.RS = _triple(kernel_size)
        self.stride = _triple(stride)
        self.padding = _triple(padding)
        self.dilation = _triple(dilation)
        kw, kb = jax.random.split(key)
        # The PyTorch module initializes to zeros; use small random values so
        # the numerics are non-trivial for the self-check.
        self.weight = jax.random.normal(
            kw, (self.K, *self.RS, self.C), dtype=dtype) * 0.1
        self.bias = (jax.random.normal(kb, (self.K,), dtype=dtype) * 0.1
                     if bias else None)

    # ---- glue: neighbor map (rule generation), pure JAX -------------------
    # NOTE: dense LUT assumes unique active coordinates; for realistic grids a
    # hashed/sorted rule builder would be needed (scalability, not numerics).
    def _neighbors(self, indices, spatial_shape, batch_size):
        HW = jnp.asarray(spatial_shape, jnp.int32)
        N = indices.shape[0]
        R0, R1, R2 = self.RS
        b = indices[:, 0]
        coords = indices[:, 1:4]

        lut = jnp.full((batch_size, *spatial_shape), -1, jnp.int32)
        lut = lut.at[b, coords[:, 0], coords[:, 1], coords[:, 2]].set(
            jnp.arange(N, dtype=jnp.int32))

        r0, r1, r2 = jnp.meshgrid(jnp.arange(R0), jnp.arange(R1),
                                  jnp.arange(R2), indexing="ij")
        offs = jnp.stack([r0.ravel(), r1.ravel(), r2.ravel()], axis=1)  # [R,3]

        stride = jnp.asarray(self.stride, jnp.int32)
        pad = jnp.asarray(self.padding, jnp.int32)
        dil = jnp.asarray(self.dilation, jnp.int32)

        in_c = coords[:, None, :] * stride - pad + offs[None, :, :] * dil
        valid = jnp.all((in_c >= 0) & (in_c < HW), axis=-1)            # [N,R]
        cc = jnp.clip(in_c, 0, HW - 1)
        nbr = lut[b[:, None], cc[..., 0], cc[..., 1], cc[..., 2]]
        return jnp.where(valid, nbr, -1)                               # [N,R]

    # ---- forward ----------------------------------------------------------
    def __call__(self, features, indices, spatial_shape, batch_size,
                 tile_n=2048, max_rc_tile=None, compute_dtype=jnp.bfloat16):
        assert len(spatial_shape) == 3
        N, C = features.shape
        K = self.K
        R0, R1, R2 = self.RS
        R = R0 * R1 * R2
        RC = R * C

        PQ = [
            (spatial_shape[d] + 2 * self.padding[d]
             - self.dilation[d] * (self.RS[d] - 1) - 1) // self.stride[d] + 1
            for d in range(3)
        ]

        if N == 0:  # degenerate: no active voxels
            return jnp.zeros((0, K), features.dtype), indices, PQ

        # im2col gather (bf16) -- see TODO(synk) in the header.
        nbr = self._neighbors(indices, spatial_shape, batch_size)      # [N,R]
        safe = jnp.clip(nbr, 0, N - 1)
        feat_c = features.astype(compute_dtype)
        zero = jnp.zeros((), compute_dtype)
        gathered = jnp.where(nbr[..., None] >= 0, feat_c[safe], zero)  # [N,R,C]
        cols = gathered.reshape(N, RC)

        # --- padding: lane alignment only (never up to a tile multiple) ---
        k_pad = _round_up(K, 128)
        rc_pad = _round_up(RC, 128)
        itm = jnp.dtype(compute_dtype).itemsize

        cap = _vmem_capacity_bytes()                 # 128 MiB v5e/v6e, 64 MiB v7x
        budget = min(int(cap * 0.75), 100 << 20)

        # Prefer a single VMEM-resident weight block (no reduction axis, no
        # accumulator RMW); otherwise chunk RC and reduce into the output.
        want_single = (max_rc_tile is None) or (max_rc_tile >= rc_pad)
        fixed_single = 2 * rc_pad * k_pad * itm + 2 * k_pad * 4
        per_row_single = 2 * (rc_pad * itm + k_pad * itm)
        single_ok = want_single and (fixed_single + 128 * per_row_single
                                     <= budget)

        if single_ok:
            tile_rc = rc_pad
            out_itm = itm
        else:
            rc_cap = max_rc_tile if max_rc_tile is not None else 512
            tile_rc = _largest_rc_divisor(rc_pad, max(128, rc_cap))
            out_itm = 4

        fixed = 2 * tile_rc * k_pad * itm + 2 * k_pad * 4
        per_row = 2 * (tile_rc * itm + k_pad * out_itm)
        tile_n_vmem = max(128, ((budget - fixed) // per_row) // 128 * 128)
        tile_n_eff = _pick_point_tile(N, min(tile_n, tile_n_vmem))
        n_pad = _round_up(N, tile_n_eff)

        cols_p = jnp.pad(cols, ((0, n_pad - N), (0, rc_pad - RC)))

        # weight [K, R0, R1, R2, C] -> [RC, K] (same r,c ordering as cols)
        w_flat = jnp.transpose(
            self.weight.reshape(K, R, C), (1, 2, 0)).reshape(RC, K)
        w_p = jnp.pad(w_flat, ((0, rc_pad - RC), (0, k_pad - K))
                      ).astype(compute_dtype)

        b = (self.bias if self.bias is not None
             else jnp.zeros((K,), jnp.float32)).astype(jnp.float32)
        b_p = jnp.pad(b, (0, k_pad - K)).reshape(1, k_pad)

        out = _subm_gemm(cols_p, w_p, b_p,
                         tile_n=tile_n_eff, tile_rc=tile_rc,
                         out_dtype=compute_dtype, real_dims=(N, RC, K))
        out = out[:N, :K].astype(features.dtype)
        return out, indices, PQ


# ----------------------------------------------------------------------------
# Demo / self-check
# ----------------------------------------------------------------------------
def _make_sparse_input(key, batch_size, spatial_shape, pts_per_batch, C):
    """Unique random active voxels per batch + random features."""
    HW0, HW1, HW2 = spatial_shape
    nvox = HW0 * HW1 * HW2
    idx_list = []
    for b in range(batch_size):
        key, sub = jax.random.split(key)
        flat = jax.random.permutation(sub, nvox)[:pts_per_batch]
        d0 = flat // (HW1 * HW2)
        d1 = (flat // HW2) % HW1
        d2 = flat % HW2
        bb = jnp.full((pts_per_batch,), b, jnp.int32)
        idx_list.append(jnp.stack(
            [bb, d0.astype(jnp.int32), d1.astype(jnp.int32),
             d2.astype(jnp.int32)], axis=1))
    indices = jnp.concatenate(idx_list, axis=0)
    key, sub = jax.random.split(key)
    features = jax.random.normal(sub, (indices.shape[0], C), jnp.float32)
    return features, indices


def _reference(conv, features, indices, spatial_shape, batch_size):
    """Pure-JAX f32 reference (same gather + jnp matmul)."""
    nbr = conv._neighbors(indices, spatial_shape, batch_size)
    N, C = features.shape
    R = conv.RS[0] * conv.RS[1] * conv.RS[2]
    gathered = jnp.where(nbr[..., None] >= 0,
                         features[jnp.clip(nbr, 0, N - 1)], 0.0)
    cols = gathered.reshape(N, R * C)
    w_flat = jnp.transpose(conv.weight.reshape(conv.K, R, C), (1, 2, 0)
                           ).reshape(R * C, conv.K)
    out = cols @ w_flat
    if conv.bias is not None:
        out = out + conv.bias[None, :]
    return out


if __name__ == "__main__":
    key = jax.random.PRNGKey(0)
    kA, kB, kdA, kdB = jax.random.split(key, 4)

    batch_size = 2
    spatial_shape = [8, 8, 8]
    pts_per_batch = 20

    # --- config A: C=4, K=8 -> single VMEM-resident RC block (fast path) ---
    convA = NaiveSubMConv3d(4, 8, 3, stride=1, padding=1, dilation=1,
                            bias=True, key=kA)
    featsA, idxA = _make_sparse_input(kdA, batch_size, spatial_shape,
                                      pts_per_batch, 4)
    outA, out_idxA, PQA = convA(featsA, idxA, spatial_shape, batch_size)
    outA = jax.block_until_ready(outA)
    refA = _reference(convA, featsA, idxA, spatial_shape, batch_size)
    assert outA.shape == (featsA.shape[0], 8)
    assert out_idxA.shape == idxA.shape
    assert PQA == spatial_shape          # k=3, pad=1, stride=1, dil=1
    # bf16 MXU inputs + bf16 writeback, f32 accumulation
    assert jnp.allclose(outA, refA, atol=3e-2, rtol=3e-2)

    # --- config B: C=16, K=24, RC tile capped at 128 -> reduction fallback ---
    convB = NaiveSubMConv3d(16, 24, 3, stride=1, padding=1, dilation=1,
                            bias=True, key=kB)
    featsB, idxB = _make_sparse_input(kdB, batch_size, spatial_shape,
                                      pts_per_batch, 16)
    outB, _, _ = convB(featsB, idxB, spatial_shape, batch_size,
                       max_rc_tile=128)
    outB = jax.block_until_ready(outB)
    refB = _reference(convB, featsB, idxB, spatial_shape, batch_size)
    assert outB.shape == (featsB.shape[0], 24)
    assert jnp.allclose(outB, refB, atol=5e-2, rtol=5e-2)

    print("KERNEL_OK")
</pallas_src>

<mosaic_0001>
module attributes {stable_mosaic.version = 11 : i64} {
  func.func @_subm_gemm_kernel(%arg0: i32, %arg1: memref<128x128xbf16, #tpu.memory_space<vmem>>, %arg2: memref<128x128xbf16, #tpu.memory_space<vmem>>, %arg3: memref<1x128xf32, #tpu.memory_space<vmem>>, %arg4: memref<128x128xbf16, #tpu.memory_space<vmem>>) attributes {dimension_semantics = [#tpu.dimension_semantics<parallel>], iteration_bounds = array<i64: 1>, scalar_prefetch = 0 : i64, scratch_operands = 0 : i64, tpu.core_type = #tpu.core_type<tc>, window_params = [{transform_indices = @transform_0, window_bounds = array<i64: 128, 128>}, {pipeline_mode = #tpu.pipeline_mode<synchronous>, transform_indices = @transform_1, window_bounds = array<i64: 128, 128>}, {pipeline_mode = #tpu.pipeline_mode<synchronous>, transform_indices = @transform_2, window_bounds = array<i64: 1, 128>}, {transform_indices = @transform_3, window_bounds = array<i64: 128, 128>}]} {
    %c0 = arith.constant 0 : index
    %c0_0 = arith.constant 0 : index
    %0 = vector.load %arg1[%c0, %c0_0] : memref<128x128xbf16, #tpu.memory_space<vmem>>, vector<128x128xbf16>
    %c0_1 = arith.constant 0 : index
    %c0_2 = arith.constant 0 : index
    %1 = vector.load %arg2[%c0_1, %c0_2] : memref<128x128xbf16, #tpu.memory_space<vmem>>, vector<128x128xbf16>
    %cst = arith.constant dense<0.000000e+00> : vector<128x128xf32>
    %2 = tpu.matmul %0, %1, %cst {dimension_numbers = #tpu.dot_dimension_numbers<[1], [0], [0], [1], [0, 0, 1, 1], [], []>} : vector<128x128xbf16>, vector<128x128xbf16>, vector<128x128xf32> -> vector<128x128xf32>
    %c0_3 = arith.constant 0 : index
    %c0_4 = arith.constant 0 : index
    %3 = vector.load %arg3[%c0_3, %c0_4] : memref<1x128xf32, #tpu.memory_space<vmem>>, vector<1x128xf32>
    %4 = vector.broadcast %3 : vector<1x128xf32> to vector<128x128xf32>
    %5 = arith.addf %2, %4 : vector<128x128xf32>
    %6 = arith.truncf %5 : vector<128x128xf32> to vector<128x128xbf16>
    %c0_5 = arith.constant 0 : index
    %c0_6 = arith.constant 0 : index
    %7 = vector.load %arg4[%c0_5, %c0_6] : memref<128x128xbf16, #tpu.memory_space<vmem>>, vector<128x128xbf16>
    tpu.vector_store %arg4[%c0_5, %c0_6], %6 {strides = array<i32>} : memref<128x128xbf16, #tpu.memory_space<vmem>>, vector<128x128xbf16>,
    return
  }
  func.func @transform_0(%arg0: i32) -> (i32, i32) {
    %c0_i32 = arith.constant 0 : i32
    %c0_i32_0 = arith.constant 0 : i32
    return %arg0, %c0_i32 : i32, i32
  }
  func.func @transform_1(%arg0: i32) -> (i32, i32) {
    %c0_i32 = arith.constant 0 : i32
    %c0_i32_0 = arith.constant 0 : i32
    %c0_i32_1 = arith.constant 0 : i32
    return %c0_i32, %c0_i32_0 : i32, i32
  }
  func.func @transform_2(%arg0: i32) -> (i32, i32) {
    %c0_i32 = arith.constant 0 : i32
    %c0_i32_0 = arith.constant 0 : i32
    %c0_i32_1 = arith.constant 0 : i32
    return %c0_i32, %c0_i32_0 : i32, i32
  }
  func.func @transform_3(%arg0: i32) -> (i32, i32) {
    %c0_i32 = arith.constant 0 : i32
    %c0_i32_0 = arith.constant 0 : i32
    return %arg0, %c0_i32 : i32, i32
  }
}

</mosaic_0001>

<llo_original>
// kernel: tpu_custom_call.1
$region0: #{tpu_custom_call.1}
  #allocation0 [shape = 'u32[]', space=smem, size = 0x4, offset = 0x4, fixed_abs, tag = 'smem constant byte address 0x4 - core index']
  #allocation1 [shape = 'u32[144,128]{1,0:T(1,128)}', space=vmem, size = 0x12000, scoped, tag = 'internal scratch']
  %s0 = inlined_call_operand.hbm [shape: bf16[128,128], index: 0, kind: input, shape index: {}]
  %s1 = inlined_call_operand.hbm [shape: bf16[128,128], index: 1, kind: input, shape index: {}]
  %s2 = inlined_call_operand.vmem [shape: f32[1,128], index: 2, kind: input, shape index: {}]
  %s3 = inlined_call_operand.hbm [shape: bf16[128,128], index: 3, kind: output, shape index: {}]
  %s4 = sld [smem:[#allocation0]]
  $region30: #{tpu_custom_call.1} parent=0
    _
  %s6 = ssub.s32 1, %s4
  %s7 = scalar_select 0, %s6, %s4
  $region1: #{tpu_custom_call.1} parent=0
    #allocation2 [shape = 'u8[32768]{0}', space=vmem, size = 0x8000, scoped, tag = 'input window, operand 0, single buffered']
    #allocation3 [shape = 's32[1]{0}', space=sflag, size = 0x4, scoped, tag = 'scoped memory for tpu_custom_call.1']
    #allocation4 [shape = 's32[1]{0}', space=sflag, size = 0x4, scoped, tag = 'scoped memory for tpu_custom_call.1']
    #allocation5 [shape = 'u8[32768]{0}', space=vmem, size = 0x8000, scoped, tag = 'input window, operand 1, single buffered']
    #allocation6 [shape = 's32[1]{0}', space=sflag, size = 0x4, scoped, tag = 'scoped memory for tpu_custom_call.1']
    #allocation7 [shape = 'u8[32768]{0}', space=vmem, size = 0x8000, scoped, tag = 'output window, operand 0, single buffered']
    %8 = vsyncpa [#allocation3], 0
    %9 = vsyncpa [#allocation6], 0
    %10 = vsyncpa [#allocation4], 0
    // Predicated region
    $region2: #{tpu_custom_call.1} parent=1 // pred_check
      _
    $region3: #{tpu_custom_call.1} parent=1 // pred_check_branch
      %12 = sbr.rel (0) target = $region5
    $region4: #{tpu_custom_call.1} parent=1 // pred_region
      %s14 = ssub.s32 1024, 1024
      %15 = vsyncadd [#allocation3], %s14
      %s16 = sshll.u32 [#allocation2], 4
      %s17 = int_to_ptr.vmem [resolvable:$true] %s16
      %22 = dma.hbm_to_vmem [thread:$0]  %s0, 1024, %s17, [#allocation3], 64, 64, 4
    $region5: #{tpu_custom_call.1} parent=1 // pred_fallthru
      _
    // Predicated region
    $region6: #{tpu_custom_call.1} parent=1 // pred_check
      _
    $region7: #{tpu_custom_call.1} parent=1 // pred_check_branch
      %24 = sbr.rel (0) target = $region9
    $region8: #{tpu_custom_call.1} parent=1 // pred_region
      %s26 = ssub.s32 1024, 1024
      %27 = vsyncadd [#allocation6], %s26
      %s28 = sshll.u32 [#allocation5], 4
      %s29 = int_to_ptr.vmem [resolvable:$true] %s28
      %34 = dma.hbm_to_vmem [thread:$0]  %s1, 1024, %s29, [#allocation6], 64, 64, 4
    $region9: #{tpu_custom_call.1} parent=1 // pred_fallthru
      _
    // Predicated region
    $region10: #{tpu_custom_call.1} parent=1 // pred_check
      _
    $region11: #{tpu_custom_call.1} parent=1 // pred_check_branch
      %36 = sbr.rel (0) target = $region13
    $region12: #{tpu_custom_call.1} parent=1 // pred_region
      _
    $region13: #{tpu_custom_call.1} parent=1 // pred_fallthru
      _
    // Predicated region
    $region14: #{tpu_custom_call.1} parent=1 // pred_check
      _
    $region15: #{tpu_custom_call.1} parent=1 // pred_check_branch
      %38 = sbr.rel (0) target = $region17
    $region16: #{tpu_custom_call.1} parent=1 // pred_region
      %39 = dma.done [#allocation3], 1024
    $region17: #{tpu_custom_call.1} parent=1 // pred_fallthru
      _
    // Predicated region
    $region18: #{tpu_custom_call.1} parent=1 // pred_check
      _
    $region19: #{tpu_custom_call.1} parent=1 // pred_check_branch
      %41 = sbr.rel (0) target = $region21
    $region20: #{tpu_custom_call.1} parent=1 // pred_region
      %42 = dma.done [#allocation6], 1024
    $region21: #{tpu_custom_call.1} parent=1 // pred_fallthru
      _
    %v44 = vld [vmem:[#allocation2] sm:$0xf]
    %v45 = vld [vmem:[#allocation2 + $0x4] sm:$0xf]
    %v46 = vld [vmem:[#allocation2 + $0x8] sm:$0xf]
    %v47 = vld [vmem:[#allocation2 + $0xc] sm:$0xf]
    %v48 = vld [vmem:[#allocation2 + $0x10] sm:$0xf]
    %v49 = vld [vmem:[#allocation2 + $0x14] sm:$0xf]
    %v50 = vld [vmem:[#allocation2 + $0x18] sm:$0xf]
    %v51 = vld [vmem:[#allocation2 + $0x1c] sm:$0xf]
    %v52 = vld [vmem:[#allocation2 + $0x20] sm:$0xf]
    %v53 = vld [vmem:[#allocation2 + $0x24] sm:$0xf]
    %v54 = vld [vmem:[#allocation2 + $0x28] sm:$0xf]
    %v55 = vld [vmem:[#allocation2 + $0x2c] sm:$0xf]
    %v56 = vld [vmem:[#allocation2 + $0x30] sm:$0xf]
    %v57 = vld [vmem:[#allocation2 + $0x34] sm:$0xf]
    %v58 = vld [vmem:[#allocation2 + $0x38] sm:$0xf]
    %v59 = vld [vmem:[#allocation2 + $0x3c] sm:$0xf]
    %v60 = vld [vmem:[#allocation5] sm:$0xf]
    %v61 = vld [vmem:[#allocation5 + $0x4] sm:$0xf]
    %v62 = vld [vmem:[#allocation5 + $0x8] sm:$0xf]
    %v63 = vld [vmem:[#allocation5 + $0xc] sm:$0xf]
    %v64 = vld [vmem:[#allocation5 + $0x10] sm:$0xf]
    %v65 = vld [vmem:[#allocation5 + $0x14] sm:$0xf]
    %v66 = vld [vmem:[#allocation5 + $0x18] sm:$0xf]
    %v67 = vld [vmem:[#allocation5 + $0x1c] sm:$0xf]
    %v68 = vld [vmem:[#allocation5 + $0x20] sm:$0xf]
    %v69 = vld [vmem:[#allocation5 + $0x24] sm:$0xf]
    %v70 = vld [vmem:[#allocation5 + $0x28] sm:$0xf]
    %v71 = vld [vmem:[#allocation5 + $0x2c] sm:$0xf]
    %v72 = vld [vmem:[#allocation5 + $0x30] sm:$0xf]
    %v73 = vld [vmem:[#allocation5 + $0x34] sm:$0xf]
    %v74 = vld [vmem:[#allocation5 + $0x38] sm:$0xf]
    %v75 = vld [vmem:[#allocation5 + $0x3c] sm:$0xf]
    %v76 = vld [vmem:[%s2] sm:$0x1]
    %v78 = vlaneseq
    %v79 = vshrl.u32 %v78, 7
    %v80 = vsub.s32 0, %v79
    %v81 = vrot.slane %v76, %v80
    %v99 = vunpack.c.l.b16 %v44
    %v100 = vunpack.c.l.b16 %v45
    %v101 = vunpack.c.l.b16 %v46
    %v102 = vunpack.c.l.b16 %v47
    %v103 = vunpack.c.l.b16 %v48
    %v104 = vunpack.c.l.b16 %v49
    %v105 = vunpack.c.l.b16 %v50
    %v106 = vunpack.c.l.b16 %v51
    %v107 = vunpack.c.l.b16 %v52
    %v108 = vunpack.c.l.b16 %v53
    %v109 = vunpack.c.l.b16 %v54
    %v110 = vunpack.c.l.b16 %v55
    %v111 = vunpack.c.l.b16 %v56
    %v112 = vunpack.c.l.b16 %v57
    %v113 = vunpack.c.l.b16 %v58
    %v114 = vunpack.c.l.b16 %v59
    %v115 = vpack.c.b16 %v100, %v99
    %v116 = vpack.c.b16 %v102, %v101
    %v117 = vpack.c.b16 %v104, %v103
    %v118 = vpack.c.b16 %v106, %v105
    %v119 = vpack.c.b16 %v108, %v107
    %v120 = vpack.c.b16 %v110, %v109
    %v121 = vpack.c.b16 %v112, %v111
    %v122 = vpack.c.b16 %v114, %v113
    %v147 = vunpack.c.l.b16 %v60
    %v148 = vunpack.c.l.b16 %v61
    %v149 = vunpack.c.l.b16 %v62
    %v150 = vunpack.c.l.b16 %v63
    %v151 = vunpack.c.l.b16 %v64
    %v152 = vunpack.c.l.b16 %v65
    %v153 = vunpack.c.l.b16 %v66
    %v154 = vunpack.c.l.b16 %v67
    %v155 = vunpack.c.l.b16 %v68
    %v156 = vunpack.c.l.b16 %v69
    %v157 = vunpack.c.l.b16 %v70
    %v158 = vunpack.c.l.b16 %v71
    %v159 = vunpack.c.l.b16 %v72
    %v160 = vunpack.c.l.b16 %v73
    %v161 = vunpack.c.l.b16 %v74
    %v162 = vunpack.c.l.b16 %v75
    %v163 = vpack.c.b16 %v148, %v147
    %v164 = vpack.c.b16 %v150, %v149
    %v165 = vpack.c.b16 %v152, %v151
    %v166 = vpack.c.b16 %v154, %v153
    %v167 = vpack.c.b16 %v156, %v155
    %v168 = vpack.c.b16 %v158, %v157
    %v169 = vpack.c.b16 %v160, %v159
    %v170 = vpack.c.b16 %v162, %v161
    %179 = vmatprep.subr.bf16.mxu0 0
    %180 = vmatpush1.bf16.msra.mxu0 %v163
    %181 = vmatprep.subr.bf16.mxu0 0
    %182 = vmatpush1.bf16.msra.mxu0 %v164
    %183 = vmatprep.subr.bf16.mxu0 0
    %184 = vmatpush1.bf16.msra.mxu0 %v165
    %185 = vmatprep.subr.bf16.mxu0 0
    %186 = vmatpush1.bf16.msra.mxu0 %v166
    %187 = vmatprep.subr.bf16.mxu0 0
    %188 = vmatpush1.bf16.msra.mxu0 %v167
    %189 = vmatprep.subr.bf16.mxu0 0
    %190 = vmatpush1.bf16.msra.mxu0 %v168
    %191 = vmatprep.subr.bf16.mxu0 0
    %192 = vmatpush1.bf16.msra.mxu0 %v169
    %193 = vmatprep.subr.bf16.mxu0 0
    %194 = vmatpush1.bf16.msra.mxu0 %v170
    %195 = vmatprep.subr.bf16.mxu0 0
    %196 = vmatpush1.bf16.msra.mxu0 0
    %197 = vmatprep.subr.bf16.mxu0 0
    %198 = vmatpush1.bf16.msra.mxu0 0
    %199 = vmatprep.subr.bf16.mxu0 0
    %200 = vmatpush1.bf16.msra.mxu0 0
    %201 = vmatprep.subr.bf16.mxu0 0
    %202 = vmatpush1.bf16.msra.mxu0 0
    %203 = vmatprep.subr.bf16.mxu0 0
    %204 = vmatpush1.bf16.msra.mxu0 0
    %205 = vmatprep.subr.bf16.mxu0 0
    %206 = vmatpush1.bf16.msra.mxu0 0
    %207 = vmatprep.subr.bf16.mxu0 0
    %208 = vmatpush1.bf16.msra.mxu0 0
    %209 = vmatprep.subr.bf16.mxu0 0
    %210 = vmatpush1.bf16.msra.mxu0 0
    %211 = vmatprep.mubr.bf16.mxu0 0
    %212 = vmatmul.mubr.bf16.gmra.mrb[0].mxu0 %v115
    %v213 = vpop.f32.mrb[0].mxu0
    %v214 = vadd.f32 %v81, %v213
    %v215 = vpop.f32.mrb[0].mxu0
    %v216 = vpop.f32.mrb[0].mxu0
    %v217 = vadd.f32 %v81, %v216
    %v218 = vpop.f32.mrb[0].mxu0
    %219 = vmatprep.mubr.bf16.mxu0 0
    %220 = vmatmul.mubr.bf16.gmra.mrb[0].mxu0 %v116
    %v221 = vpop.f32.mrb[0].mxu0
    %v222 = vadd.f32 %v81, %v221
    %v223 = vpop.f32.mrb[0].mxu0
    %v224 = vpop.f32.mrb[0].mxu0
    %v225 = vadd.f32 %v81, %v224
    %v226 = vpop.f32.mrb[0].mxu0
    %227 = vmatprep.mubr.bf16.mxu0 0
    %228 = vmatmul.mubr.bf16.gmra.mrb[0].mxu0 %v117
    %v229 = vpop.f32.mrb[0].mxu0
    %v230 = vadd.f32 %v81, %v229
    %v231 = vpop.f32.mrb[0].mxu0
    %v232 = vpop.f32.mrb[0].mxu0
    %v233 = vadd.f32 %v81, %v232
    %v234 = vpop.f32.mrb[0].mxu0
    %235 = vmatprep.mubr.bf16.mxu0 0
    %236 = vmatmul.mubr.bf16.gmra.mrb[0].mxu0 %v118
    %v237 = vpop.f32.mrb[0].mxu0
    %v238 = vadd.f32 %v81, %v237
    %v239 = vpop.f32.mrb[0].mxu0
    %v240 = vpop.f32.mrb[0].mxu0
    %v241 = vadd.f32 %v81, %v240
    %v242 = vpop.f32.mrb[0].mxu0
    %243 = vmatprep.mubr.bf16.mxu0 0
    %244 = vmatmul.mubr.bf16.gmra.mrb[0].mxu0 %v119
    %v245 = vpop.f32.mrb[0].mxu0
    %v246 = vadd.f32 %v81, %v245
    %v247 = vpop.f32.mrb[0].mxu0
    %v248 = vpop.f32.mrb[0].mxu0
    %v249 = vadd.f32 %v81, %v248
    %v250 = vpop.f32.mrb[0].mxu0
    %251 = vmatprep.mubr.bf16.mxu0 0
    %252 = vmatmul.mubr.bf16.gmra.mrb[0].mxu0 %v120
    %v253 = vpop.f32.mrb[0].mxu0
    %v254 = vadd.f32 %v81, %v253
    %v255 = vpop.f32.mrb[0].mxu0
    %v256 = vpop.f32.mrb[0].mxu0
    %v257 = vadd.f32 %v81, %v256
    %v258 = vpop.f32.mrb[0].mxu0
    %259 = vmatprep.mubr.bf16.mxu0 0
    %260 = vmatmul.mubr.bf16.gmra.mrb[0].mxu0 %v121
    %v261 = vpop.f32.mrb[0].mxu0
    %v262 = vadd.f32 %v81, %v261
    %v263 = vpop.f32.mrb[0].mxu0
    %v264 = vpop.f32.mrb[0].mxu0
    %v265 = vadd.f32 %v81, %v264
    %v266 = vpop.f32.mrb[0].mxu0
    %267 = vmatprep.mubr.bf16.mxu0 0
    %268 = vmatmul.mubr.bf16.gmra.mrb[0].mxu0 %v122
    %v269 = vpop.f32.mrb[0].mxu0
    %v270 = vadd.f32 %v81, %v269
    %v271 = vpop.f32.mrb[0].mxu0
    %v272 = vpop.f32.mrb[0].mxu0
    %v273 = vadd.f32 %v81, %v272
    %v274 = vpop.f32.mrb[0].mxu0
    %275 = vdwg.mxu0
    %v276 = vpack.c.bf16 %v217, %v214
    %v277 = vpack.c.bf16 %v225, %v222
    %v278 = vpack.c.bf16 %v233, %v230
    %v279 = vpack.c.bf16 %v241, %v238
    %v280 = vpack.c.bf16 %v249, %v246
    %v281 = vpack.c.bf16 %v257, %v254
    %v282 = vpack.c.bf16 %v265, %v262
    %v283 = vpack.c.bf16 %v273, %v270
    %v292 = vunpack.c.l.b16 %v276
    %v293 = vunpack.c.h.b16 %v276
    %v294 = vunpack.c.l.b16 %v277
    %v295 = vunpack.c.h.b16 %v277
    %v296 = vunpack.c.l.b16 %v278
    %v297 = vunpack.c.h.b16 %v278
    %v298 = vunpack.c.l.b16 %v279
    %v299 = vunpack.c.h.b16 %v279
    %v300 = vunpack.c.l.b16 %v280
    %v301 = vunpack.c.h.b16 %v280
    %v302 = vunpack.c.l.b16 %v281
    %v303 = vunpack.c.h.b16 %v281
    %v304 = vunpack.c.l.b16 %v282
    %v305 = vunpack.c.h.b16 %v282
    %v306 = vunpack.c.l.b16 %v283
    %v307 = vunpack.c.h.b16 %v283
    %v308 = vpack.c.b16 %v292, %v292
    %v309 = vpack.c.b16 %v293, %v293
    %v310 = vpack.c.b16 %v294, %v294
    %v311 = vpack.c.b16 %v295, %v295
    %v312 = vpack.c.b16 %v296, %v296
    %v313 = vpack.c.b16 %v297, %v297
    %v314 = vpack.c.b16 %v298, %v298
    %v315 = vpack.c.b16 %v299, %v299
    %v316 = vpack.c.b16 %v300, %v300
    %v317 = vpack.c.b16 %v301, %v301
    %v318 = vpack.c.b16 %v302, %v302
    %v319 = vpack.c.b16 %v303, %v303
    %v320 = vpack.c.b16 %v304, %v304
    %v321 = vpack.c.b16 %v305, %v305
    %v322 = vpack.c.b16 %v306, %v306
    %v323 = vpack.c.b16 %v307, %v307
    %340 = vst [vmem:[#allocation7] sm:$0xf] %v308
    %341 = vst [vmem:[#allocation7 + $0x4] sm:$0xf] %v309
    %342 = vst [vmem:[#allocation7 + $0x8] sm:$0xf] %v310
    %343 = vst [vmem:[#allocation7 + $0xc] sm:$0xf] %v311
    %344 = vst [vmem:[#allocation7 + $0x10] sm:$0xf] %v312
    %345 = vst [vmem:[#allocation7 + $0x14] sm:$0xf] %v313
    %346 = vst [vmem:[#allocation7 + $0x18] sm:$0xf] %v314
    %347 = vst [vmem:[#allocation7 + $0x1c] sm:$0xf] %v315
    %348 = vst [vmem:[#allocation7 + $0x20] sm:$0xf] %v316
    %349 = vst [vmem:[#allocation7 + $0x24] sm:$0xf] %v317
    %350 = vst [vmem:[#allocation7 + $0x28] sm:$0xf] %v318
    %351 = vst [vmem:[#allocation7 + $0x2c] sm:$0xf] %v319
    %352 = vst [vmem:[#allocation7 + $0x30] sm:$0xf] %v320
    %353 = vst [vmem:[#allocation7 + $0x34] sm:$0xf] %v321
    %354 = vst [vmem:[#allocation7 + $0x38] sm:$0xf] %v322
    %355 = vst [vmem:[#allocation7 + $0x3c] sm:$0xf] %v323
    // Predicated region
    $region22: #{tpu_custom_call.1} parent=1 // pred_check
      _
    $region23: #{tpu_custom_call.1} parent=1 // pred_check_branch
      %357 = sbr.rel (0) target = $region25
    $region24: #{tpu_custom_call.1} parent=1 // pred_region
      %s359 = ssub.s32 1024, 1024
      %360 = vsyncadd [#allocation4], %s359
      %s361 = sshll.u32 [#allocation7], 4
      %s362 = int_to_ptr.vmem [resolvable:$true] %s361
      %367 = dma.vmem_to_hbm [thread:$0]  %s362, 1024, %s3, [#allocation4], 64, 64, 4
    $region25: #{tpu_custom_call.1} parent=1 // pred_fallthru
      _
    // Predicated region
    $region26: #{tpu_custom_call.1} parent=1 // pred_check
      _
    $region27: #{tpu_custom_call.1} parent=1 // pred_check_branch
      %369 = sbr.rel (0) target = $region29
    $region28: #{tpu_custom_call.1} parent=1 // pred_region
      %370 = dma.done [#allocation4], 1024
    $region29: #{tpu_custom_call.1} parent=1 // pred_fallthru
      _
    %371 = vsyncpa [#allocation3], 1
    %372 = vsyncpa [#allocation6], 1
    %373 = vsyncpa [#allocation4], 1

</llo_original>
